<compile_context>
chip_gen: v5e
topology: v5e:2x2
jax: 0.10.0
libtpu: 0.0.40
codegen_flags: <defaults>
</compile_context>

<pallas_src>
import functools

import jax
import jax.numpy as jnp
from jax.experimental import pallas as pl
from jax.experimental.pallas import tpu as pltpu


def _round_up(a, m):
    return ((a + m - 1) // m) * m


def _lusch_kernel(x_ref, w_ref, b_ref, o_ref, *, input_dim, hidden_dim):
    """Feature-major MLP: activations are (features, B_TILE).

    w_ref: (5, P, P)  padded, pre-transposed weights (out, in) per layer
    b_ref: (5, P, 1)  padded column biases per layer
    """
    x = x_ref[...]                                            # (input_dim, Bt)

    def layer(idx, rows, cols, a, activate):
        w = w_ref[idx][:rows, :cols]                          # static slice of packed weights
        b = b_ref[idx][:rows, :]                              # (rows, 1), broadcasts over lanes
        y = jnp.dot(w, a, preferred_element_type=jnp.float32) + b
        return jnp.tanh(y) if activate else y

    h = layer(0, hidden_dim, hidden_dim if False else input_dim, x, True)  # enc L1 (+ folded normalize)
    h = layer(1, hidden_dim, hidden_dim, h, True)                          # enc L2
    h = layer(2, hidden_dim, hidden_dim, h, True)                          # enc L3 fused with dec L1
    h = layer(3, hidden_dim, hidden_dim, h, True)                          # dec L2
    o_ref[...] = layer(4, input_dim, hidden_dim, h, False)                 # dec L3 (+ folded unnormalize)


def make_lusch_params(key, input_dim, koopman_dim, hidden_dim):
    """Deterministic init mimicking nn.Linear default (uniform +- 1/sqrt(fan_in)).
    Weights are stored transposed: shape (in_features, out_features)."""
    dims = [
        ("we1", input_dim, hidden_dim),
        ("we2", hidden_dim, hidden_dim),
        ("we3", hidden_dim, koopman_dim),
        ("wd1", koopman_dim, hidden_dim),
        ("wd2", hidden_dim, hidden_dim),
        ("wd3", hidden_dim, input_dim),
    ]
    params = {}
    for name, fan_in, fan_out in dims:
        key, kw, kb = jax.random.split(key, 3)
        bound = 1.0 / jnp.sqrt(float(fan_in))
        params[name] = jax.random.uniform(
            kw, (fan_in, fan_out), jnp.float32, -bound, bound)
        params["b" + name[1:]] = jax.random.uniform(
            kb, (1, fan_out), jnp.float32, -bound, bound)
    # registered buffers: mu = zeros, std = ones (may be overwritten with stats)
    params["mu"] = jnp.zeros((1, input_dim), jnp.float32)
    params["std"] = jnp.ones((1, input_dim), jnp.float32)
    return params


def pack_lusch_params(p, input_dim, koopman_dim, hidden_dim):
    """One-time parameter prep: fold mu/std, fuse enc-L3 with dec-L1, transpose to
    feature-major (out, in), zero-pad to a common (P, P) and stack into 2 operands."""
    hp = jax.lax.Precision.HIGHEST

    # Fold normalization into encoder layer 1:  ((x-mu)/std) @ we1 + be1
    inv_std_col = (1.0 / p["std"]).reshape(input_dim, 1)          # (in, 1)
    we1f = p["we1"] * inv_std_col                                 # (in, hid)
    be1f = p["be1"] - jnp.dot(p["mu"] / p["std"], p["we1"], precision=hp)

    # Fuse encoder layer 3 with decoder layer 1 (no tanh between them):
    #   (h @ we3 + be3) @ wd1 + bd1 == h @ (we3 @ wd1) + (be3 @ wd1 + bd1)
    wk = jnp.dot(p["we3"], p["wd1"], precision=hp)                # (hid, hid)
    bk = jnp.dot(p["be3"], p["wd1"], precision=hp) + p["bd1"]     # (1, hid)

    # Fold unnormalization into decoder layer 3:  std*(h @ wd3 + bd3) + mu
    wd3f = p["wd3"] * p["std"]                                    # (hid, in)
    bd3f = p["bd3"] * p["std"] + p["mu"]                          # (1, in)

    # Feature-major weights (out, in) and column biases (out, 1)
    Ws = [we1f.T, p["we2"].T, wk.T, p["wd2"].T, wd3f.T]
    bs = [be1f.T, p["be2"].T, bk.T, p["bd2"].T, bd3f.T]

    P = _round_up(max(hidden_dim, input_dim), 8)

    def pad2(a, r, c):
        return jnp.pad(a, ((0, r - a.shape[0]), (0, c - a.shape[1])))

    w_pack = jnp.stack([pad2(w, P, P) for w in Ws]).astype(jnp.float32)   # (5, P, P)
    b_pack = jnp.stack([pad2(b, P, 1) for b in bs]).astype(jnp.float32)   # (5, P, 1)

    return {"w": w_pack, "b": b_pack,
            "input_dim": input_dim, "hidden_dim": hidden_dim}


def lusch_forward(x, packed):
    B, input_dim = x.shape
    assert input_dim == packed["input_dim"]
    hidden_dim = packed["hidden_dim"]

    # Batch tile rides the lane axis: multiple of 128, capped for VMEM headroom
    # (also comfortable on v7x's smaller 64 MiB VMEM).
    B_TILE = min(1024, _round_up(max(B, 1), 128))
    Bp = _round_up(B, B_TILE)

    # Feature-major input, zero-padded along the batch (lane) axis.
    x_t = jnp.pad(x.T.astype(jnp.float32), ((0, 0), (0, Bp - B)))

    kernel = functools.partial(_lusch_kernel,
                               input_dim=input_dim, hidden_dim=hidden_dim)

    out_t = pl.pallas_call(
        kernel,
        out_shape=jax.ShapeDtypeStruct((input_dim, Bp), jnp.float32),
        grid_spec=pltpu.PrefetchScalarGridSpec(
            num_scalar_prefetch=0,
            grid=(Bp // B_TILE,),
            in_specs=[
                # activation tile: new block every grid step -> pipelined DMA
                pl.BlockSpec((input_dim, B_TILE), lambda i: (0, i)),
                # packed weights / biases: constant index_map -> DMA'd once, VMEM-resident
                pl.BlockSpec(packed["w"].shape, lambda i: (0, 0, 0)),
                pl.BlockSpec(packed["b"].shape, lambda i: (0, 0, 0)),
            ],
            out_specs=pl.BlockSpec((input_dim, B_TILE), lambda i: (0, i)),
        ),
        compiler_params=pltpu.CompilerParams(
            dimension_semantics=("parallel",)),
    )(x_t, packed["w"], packed["b"])

    return out_t.T[:B]


def lusch_forward_ref(x, p):
    """Pure-JAX reference implementing the original (unfused) PyTorch math."""
    hp = jax.lax.Precision.HIGHEST
    xn = (x - p["mu"]) / p["std"]
    h = jnp.tanh(jnp.dot(xn, p["we1"], precision=hp) + p["be1"])
    h = jnp.tanh(jnp.dot(h, p["we2"], precision=hp) + p["be2"])
    z = jnp.dot(h, p["we3"], precision=hp) + p["be3"]
    h = jnp.tanh(jnp.dot(z, p["wd1"], precision=hp) + p["bd1"])
    h = jnp.tanh(jnp.dot(h, p["wd2"], precision=hp) + p["bd2"])
    y = jnp.dot(h, p["wd3"], precision=hp) + p["bd3"]
    return p["std"] * y + p["mu"]


if __name__ == "__main__":
    key = jax.random.PRNGKey(0)
    key, kx1, kx2, kmu, kstd = jax.random.split(key, 5)

    input_dim, koopman_dim, hidden_dim = 4, 8, 32

    params = make_lusch_params(key, input_dim, koopman_dim, hidden_dim)
    # Non-trivial normalization buffers (as if fitted to data) to exercise the fold.
    params["mu"] = jax.random.normal(kmu, (1, input_dim), jnp.float32)
    params["std"] = 0.5 + jax.random.uniform(kstd, (1, input_dim), jnp.float32)

    packed = pack_lusch_params(params, input_dim, koopman_dim, hidden_dim)

    # Small batch (single tile) and a larger non-aligned batch (multi-step grid + padding).
    for batch, kx in ((8, kx1), (3000, kx2)):
        x = jax.random.normal(kx, (batch, input_dim), jnp.float32)
        out = jax.block_until_ready(lusch_forward(x, packed))
        ref = lusch_forward_ref(x, params)
        assert out.shape == (batch, input_dim)
        err = float(jnp.max(jnp.abs(out - ref)))
        assert jnp.allclose(out, ref, atol=1e-4, rtol=1e-4), f"max abs err {err}"

    # TODO(synk): KoopmanOperator.forward (sequential koopman rollout with a
    # per-step eigenvalue-parameterized block-diagonal matrix) is not part of
    # Lusch.forward; not implemented here.
    print("KERNEL_OK")
</pallas_src>

<mosaic_0001>
module attributes {stable_mosaic.version = 11 : i64} {
  func.func @_lusch_kernel(%arg0: i32, %arg1: memref<4x128xf32, #tpu.memory_space<vmem>>, %arg2: memref<5x32x32xf32, #tpu.memory_space<vmem>>, %arg3: memref<5x32x1xf32, #tpu.memory_space<vmem>>, %arg4: memref<4x128xf32, #tpu.memory_space<vmem>>) attributes {dimension_semantics = [#tpu.dimension_semantics<parallel>], iteration_bounds = array<i64: 1>, scalar_prefetch = 0 : i64, scratch_operands = 0 : i64, tpu.core_type = #tpu.core_type<tc>, window_params = [{transform_indices = @transform_0, window_bounds = array<i64: 4, 128>}, {pipeline_mode = #tpu.pipeline_mode<synchronous>, transform_indices = @transform_1, window_bounds = array<i64: 5, 32, 32>}, {pipeline_mode = #tpu.pipeline_mode<synchronous>, transform_indices = @transform_2, window_bounds = array<i64: 5, 32, 1>}, {transform_indices = @transform_3, window_bounds = array<i64: 4, 128>}]} {
    %c0 = arith.constant 0 : index
    %c0_0 = arith.constant 0 : index
    %0 = vector.load %arg1[%c0, %c0_0] : memref<4x128xf32, #tpu.memory_space<vmem>>, vector<4x128xf32>
    %c0_1 = arith.constant 0 : index
    %c0_2 = arith.constant 0 : index
    %c0_3 = arith.constant 0 : index
    %1 = vector.load %arg2[%c0_1, %c0_2, %c0_3] : memref<5x32x32xf32, #tpu.memory_space<vmem>>, vector<1x32x32xf32>
    %2 = vector.shape_cast %1 : vector<1x32x32xf32> to vector<32x32xf32>
    %3 = vector.extract_strided_slice %2 {offsets = [0, 0], sizes = [32, 4], strides = [1, 1]} : vector<32x32xf32> to vector<32x4xf32>
    %c0_4 = arith.constant 0 : index
    %c0_5 = arith.constant 0 : index
    %c0_6 = arith.constant 0 : index
    %4 = vector.load %arg3[%c0_4, %c0_5, %c0_6] : memref<5x32x1xf32, #tpu.memory_space<vmem>>, vector<1x32x1xf32>
    %5 = vector.shape_cast %4 : vector<1x32x1xf32> to vector<32x1xf32>
    %cst = arith.constant dense<0.000000e+00> : vector<32x128xf32>
    %6 = tpu.matmul %3, %0, %cst {dimension_numbers = #tpu.dot_dimension_numbers<[1], [0], [0], [1], [0, 0, 1, 1], [], []>} : vector<32x4xf32>, vector<4x128xf32>, vector<32x128xf32> -> vector<32x128xf32>
    %7 = vector.broadcast %5 : vector<32x1xf32> to vector<32x128xf32>
    %8 = arith.addf %6, %7 : vector<32x128xf32>
    %9 = math.tanh %8 : vector<32x128xf32>
    %c1 = arith.constant 1 : index
    %c0_7 = arith.constant 0 : index
    %c0_8 = arith.constant 0 : index
    %10 = vector.load %arg2[%c1, %c0_7, %c0_8] : memref<5x32x32xf32, #tpu.memory_space<vmem>>, vector<1x32x32xf32>
    %11 = vector.shape_cast %10 : vector<1x32x32xf32> to vector<32x32xf32>
    %c1_9 = arith.constant 1 : index
    %c0_10 = arith.constant 0 : index
    %c0_11 = arith.constant 0 : index
    %12 = vector.load %arg3[%c1_9, %c0_10, %c0_11] : memref<5x32x1xf32, #tpu.memory_space<vmem>>, vector<1x32x1xf32>
    %13 = vector.shape_cast %12 : vector<1x32x1xf32> to vector<32x1xf32>
    %cst_12 = arith.constant dense<0.000000e+00> : vector<32x128xf32>
    %14 = tpu.matmul %11, %9, %cst_12 {dimension_numbers = #tpu.dot_dimension_numbers<[1], [0], [0], [1], [0, 0, 1, 1], [], []>} : vector<32x32xf32>, vector<32x128xf32>, vector<32x128xf32> -> vector<32x128xf32>
    %15 = vector.broadcast %13 : vector<32x1xf32> to vector<32x128xf32>
    %16 = arith.addf %14, %15 : vector<32x128xf32>
    %17 = math.tanh %16 : vector<32x128xf32>
    %c2 = arith.constant 2 : index
    %c0_13 = arith.constant 0 : index
    %c0_14 = arith.constant 0 : index
    %18 = vector.load %arg2[%c2, %c0_13, %c0_14] : memref<5x32x32xf32, #tpu.memory_space<vmem>>, vector<1x32x32xf32>
    %19 = vector.shape_cast %18 : vector<1x32x32xf32> to vector<32x32xf32>
    %c2_15 = arith.constant 2 : index
    %c0_16 = arith.constant 0 : index
    %c0_17 = arith.constant 0 : index
    %20 = vector.load %arg3[%c2_15, %c0_16, %c0_17] : memref<5x32x1xf32, #tpu.memory_space<vmem>>, vector<1x32x1xf32>
    %21 = vector.shape_cast %20 : vector<1x32x1xf32> to vector<32x1xf32>
    %cst_18 = arith.constant dense<0.000000e+00> : vector<32x128xf32>
    %22 = tpu.matmul %19, %17, %cst_18 {dimension_numbers = #tpu.dot_dimension_numbers<[1], [0], [0], [1], [0, 0, 1, 1], [], []>} : vector<32x32xf32>, vector<32x128xf32>, vector<32x128xf32> -> vector<32x128xf32>
    %23 = vector.broadcast %21 : vector<32x1xf32> to vector<32x128xf32>
    %24 = arith.addf %22, %23 : vector<32x128xf32>
    %25 = math.tanh %24 : vector<32x128xf32>
    %c3 = arith.constant 3 : index
    %c0_19 = arith.constant 0 : index
    %c0_20 = arith.constant 0 : index
    %26 = vector.load %arg2[%c3, %c0_19, %c0_20] : memref<5x32x32xf32, #tpu.memory_space<vmem>>, vector<1x32x32xf32>
    %27 = vector.shape_cast %26 : vector<1x32x32xf32> to vector<32x32xf32>
    %c3_21 = arith.constant 3 : index
    %c0_22 = arith.constant 0 : index
    %c0_23 = arith.constant 0 : index
    %28 = vector.load %arg3[%c3_21, %c0_22, %c0_23] : memref<5x32x1xf32, #tpu.memory_space<vmem>>, vector<1x32x1xf32>
    %29 = vector.shape_cast %28 : vector<1x32x1xf32> to vector<32x1xf32>
    %cst_24 = arith.constant dense<0.000000e+00> : vector<32x128xf32>
    %30 = tpu.matmul %27, %25, %cst_24 {dimension_numbers = #tpu.dot_dimension_numbers<[1], [0], [0], [1], [0, 0, 1, 1], [], []>} : vector<32x32xf32>, vector<32x128xf32>, vector<32x128xf32> -> vector<32x128xf32>
    %31 = vector.broadcast %29 : vector<32x1xf32> to vector<32x128xf32>
    %32 = arith.addf %30, %31 : vector<32x128xf32>
    %33 = math.tanh %32 : vector<32x128xf32>
    %c4 = arith.constant 4 : index
    %c0_25 = arith.constant 0 : index
    %c0_26 = arith.constant 0 : index
    %34 = vector.load %arg2[%c4, %c0_25, %c0_26] : memref<5x32x32xf32, #tpu.memory_space<vmem>>, vector<1x32x32xf32>
    %35 = vector.shape_cast %34 : vector<1x32x32xf32> to vector<32x32xf32>
    %36 = vector.extract_strided_slice %35 {offsets = [0, 0], sizes = [4, 32], strides = [1, 1]} : vector<32x32xf32> to vector<4x32xf32>
    %c4_27 = arith.constant 4 : index
    %c0_28 = arith.constant 0 : index
    %c0_29 = arith.constant 0 : index
    %37 = vector.load %arg3[%c4_27, %c0_28, %c0_29] : memref<5x32x1xf32, #tpu.memory_space<vmem>>, vector<1x32x1xf32>
    %38 = vector.shape_cast %37 : vector<1x32x1xf32> to vector<32x1xf32>
    %39 = vector.extract_strided_slice %38 {offsets = [0, 0], sizes = [4, 1], strides = [1, 1]} : vector<32x1xf32> to vector<4x1xf32>
    %cst_30 = arith.constant dense<0.000000e+00> : vector<4x128xf32>
    %40 = tpu.matmul %36, %33, %cst_30 {dimension_numbers = #tpu.dot_dimension_numbers<[1], [0], [0], [1], [0, 0, 1, 1], [], []>} : vector<4x32xf32>, vector<32x128xf32>, vector<4x128xf32> -> vector<4x128xf32>
    %41 = vector.broadcast %39 : vector<4x1xf32> to vector<4x128xf32>
    %42 = arith.addf %40, %41 : vector<4x128xf32>
    %c0_31 = arith.constant 0 : index
    %c0_32 = arith.constant 0 : index
    %43 = vector.load %arg4[%c0_31, %c0_32] : memref<4x128xf32, #tpu.memory_space<vmem>>, vector<4x128xf32>
    tpu.vector_store %arg4[%c0_31, %c0_32], %42 {strides = array<i32>} : memref<4x128xf32, #tpu.memory_space<vmem>>, vector<4x128xf32>,
    return
  }
  func.func @transform_0(%arg0: i32) -> (i32, i32) {
    %c0_i32 = arith.constant 0 : i32
    %c0_i32_0 = arith.constant 0 : i32
    return %c0_i32, %arg0 : i32, i32
  }
  func.func @transform_1(%arg0: i32) -> (i32, i32, i32) {
    %c0_i32 = arith.constant 0 : i32
    %c0_i32_0 = arith.constant 0 : i32
    %c0_i32_1 = arith.constant 0 : i32
    %c0_i32_2 = arith.constant 0 : i32
    return %c0_i32, %c0_i32_0, %c0_i32_1 : i32, i32, i32
  }
  func.func @transform_2(%arg0: i32) -> (i32, i32, i32) {
    %c0_i32 = arith.constant 0 : i32
    %c0_i32_0 = arith.constant 0 : i32
    %c0_i32_1 = arith.constant 0 : i32
    %c0_i32_2 = arith.constant 0 : i32
    return %c0_i32, %c0_i32_0, %c0_i32_1 : i32, i32, i32
  }
  func.func @transform_3(%arg0: i32) -> (i32, i32) {
    %c0_i32 = arith.constant 0 : i32
    %c0_i32_0 = arith.constant 0 : i32
    return %c0_i32, %arg0 : i32, i32
  }
}

</mosaic_0001>

<llo_original>
// kernel: tpu_custom_call.1
$region0: #{tpu_custom_call.1}
  #allocation0 [shape = 'u32[]', space=smem, size = 0x4, offset = 0x4, fixed_abs, tag = 'smem constant byte address 0x4 - core index']
  #allocation1 [shape = 'u32[72,128]{1,0:T(1,128)}', space=vmem, size = 0x9000, scoped, tag = 'internal scratch']
  %s0 = inlined_call_operand.vmem [shape: f32[4,128], index: 0, kind: input, shape index: {}]
  %s1 = inlined_call_operand.vmem [shape: f32[5,32,32], index: 1, kind: input, shape index: {}]
  %s2 = inlined_call_operand.vmem [shape: f32[5,32,1], index: 2, kind: input, shape index: {}]
  %s3 = inlined_call_operand.hbm [shape: f32[4,128], index: 3, kind: output, shape index: {}]
  %s4 = sld [smem:[#allocation0]]
  $region22: #{tpu_custom_call.1} parent=0
    _
  %s6 = ssub.s32 1, %s4
  %s7 = scalar_select 0, %s6, %s4
  $region1: #{tpu_custom_call.1} parent=0
    #allocation2 [shape = 'u8[2048]{0}', space=vmem, size = 0x800, scoped, tag = 'output window, operand 0, single buffered']
    #allocation3 [shape = 's32[1]{0}', space=sflag, size = 0x4, scoped, tag = 'scoped memory for tpu_custom_call.1']
    %8 = vsyncpa [#allocation3], 0
    // Predicated region
    $region2: #{tpu_custom_call.1} parent=1 // pred_check
      _
    $region3: #{tpu_custom_call.1} parent=1 // pred_check_branch
      %10 = sbr.rel (0) target = $region5
    $region4: #{tpu_custom_call.1} parent=1 // pred_region
      _
    $region5: #{tpu_custom_call.1} parent=1 // pred_fallthru
      _
    // Predicated region
    $region6: #{tpu_custom_call.1} parent=1 // pred_check
      _
    $region7: #{tpu_custom_call.1} parent=1 // pred_check_branch
      %12 = sbr.rel (0) target = $region9
    $region8: #{tpu_custom_call.1} parent=1 // pred_region
      _
    $region9: #{tpu_custom_call.1} parent=1 // pred_fallthru
      _
    // Predicated region
    $region10: #{tpu_custom_call.1} parent=1 // pred_check
      _
    $region11: #{tpu_custom_call.1} parent=1 // pred_check_branch
      %14 = sbr.rel (0) target = $region13
    $region12: #{tpu_custom_call.1} parent=1 // pred_region
      _
    $region13: #{tpu_custom_call.1} parent=1 // pred_fallthru
      _
    %v15 = vld [vmem:[%s0] sm:$0xf]
    %v16 = vld [vmem:[%s1] sm:$0xff]
    %v17 = vld [vmem:[%s1 + $0x8] sm:$0xff]
    %v18 = vld [vmem:[%s1 + $0x10] sm:$0xff]
    %v19 = vld [vmem:[%s1 + $0x18] sm:$0xff]
    %v20 = vld [vmem:[%s2] sm:$0xff]
    %v21 = vld [vmem:[%s2 + $0x8] sm:$0xff]
    %v22 = vld [vmem:[%s2 + $0x10] sm:$0xff]
    %v23 = vld [vmem:[%s2 + $0x18] sm:$0xff]
    %25 = vset.pattern.permute.xlu0 0
    %26 = vperm.xlu0 %25, %v20
    %v27 = vpop.permute.xlu0 %26
    %30 = vset.pattern.permute.xlu0 0
    %31 = vperm.xlu0 %30, %v21
    %v32 = vpop.permute.xlu0 %31
    %35 = vset.pattern.permute.xlu0 0
    %36 = vperm.xlu0 %35, %v22
    %v37 = vpop.permute.xlu0 %36
    %40 = vset.pattern.permute.xlu0 0
    %41 = vperm.xlu0 %40, %v23
    %v42 = vpop.permute.xlu0 %41
    %vm44 = vcmask 31744
    %v46 = vsel %vm44, %v16, 0
    %v49 = vsel %vm44, %v17, 0
    %v52 = vsel %vm44, %v18, 0
    %v55 = vsel %vm44, %v19, 0
    %vm57 = vcmask 1043456
    %v59 = vsel %vm57, %v15, 0
    %61 = vmatpush.msra.mxu0 0.0
    %62 = vmatpush.msra.mxu0 0.0
    %63 = vmatpush.msra.mxu0 0.0
    %64 = vmatpush.msra.mxu0 0.0
    %65 = vmatpush.msra.mxu0 0.0
    %66 = vmatpush.msra.mxu0 0.0
    %67 = vmatpush.msra.mxu0 0.0
    %68 = vmatpush.msra.mxu0 0.0
    %69 = vmatpush.msra.mxu0 0.0
    %70 = vmatpush.msra.mxu0 0.0
    %71 = vmatpush.msra.mxu0 0.0
    %72 = vmatpush.msra.mxu0 0.0
    %73 = vmatpush.msra.mxu0 0.0
    %74 = vmatpush.msra.mxu0 0.0
    %75 = vmatpush.msra.mxu0 0.0
    %76 = vmatpush.msra.mxu0 %v59
    %77 = vmatmul.f32.gmra.mxu0 %v46
    %v78 = vpop.f32.mrf.mxu0
    %v79 = vadd.f32 %v27, %v78
    %80 = vmatmul.f32.gmra.mxu0 %v49
    %v81 = vpop.f32.mrf.mxu0
    %v82 = vadd.f32 %v32, %v81
    %83 = vmatmul.f32.gmra.mxu0 %v52
    %v84 = vpop.f32.mrf.mxu0
    %v85 = vadd.f32 %v37, %v84
    %86 = vmatmul.f32.gmra.mxu0 %v55
    %v87 = vpop.f32.mrf.mxu0
    %v88 = vadd.f32 %v42, %v87
    %89 = vdwg.mxu0
    %v90 = vtanh.pop %v79
    %v91 = vtanh.pop %v82
    %v92 = vtanh.pop %v85
    %v93 = vtanh.pop %v88
    %s94 = scalar_lea.vmem %s1, 32
    %v95 = vld [vmem:[%s94] sm:$0xff]
    %v96 = vld [vmem:[%s94 + $0x8] sm:$0xff]
    %v97 = vld [vmem:[%s94 + $0x10] sm:$0xff]
    %v98 = vld [vmem:[%s94 + $0x18] sm:$0xff]
    %s99 = scalar_lea.vmem %s2, 32
    %v100 = vld [vmem:[%s99] sm:$0xff]
    %v101 = vld [vmem:[%s99 + $0x8] sm:$0xff]
    %v102 = vld [vmem:[%s99 + $0x10] sm:$0xff]
    %v103 = vld [vmem:[%s99 + $0x18] sm:$0xff]
    %105 = vset.pattern.permute.xlu0 0
    %106 = vperm.xlu0 %105, %v100
    %v107 = vpop.permute.xlu0 %106
    %110 = vset.pattern.permute.xlu0 0
    %111 = vperm.xlu0 %110, %v101
    %v112 = vpop.permute.xlu0 %111
    %115 = vset.pattern.permute.xlu0 0
    %116 = vperm.xlu0 %115, %v102
    %v117 = vpop.permute.xlu0 %116
    %120 = vset.pattern.permute.xlu0 0
    %121 = vperm.xlu0 %120, %v103
    %v122 = vpop.permute.xlu0 %121
    %vm124 = vcmask 261120
    %v126 = vsel %vm124, %v95, 0
    %v129 = vsel %vm124, %v96, 0
    %v132 = vsel %vm124, %v97, 0
    %v135 = vsel %vm124, %v98, 0
    %137 = vmatpush.msra.mxu0 0.0
    %138 = vmatpush.msra.mxu0 0.0
    %139 = vmatpush.msra.mxu0 0.0
    %140 = vmatpush.msra.mxu0 0.0
    %141 = vmatpush.msra.mxu0 0.0
    %142 = vmatpush.msra.mxu0 0.0
    %143 = vmatpush.msra.mxu0 0.0
    %144 = vmatpush.msra.mxu0 0.0
    %145 = vmatpush.msra.mxu0 0.0
    %146 = vmatpush.msra.mxu0 0.0
    %147 = vmatpush.msra.mxu0 0.0
    %148 = vmatpush.msra.mxu0 0.0
    %149 = vmatpush.msra.mxu0 %v93
    %150 = vmatpush.msra.mxu0 %v92
    %151 = vmatpush.msra.mxu0 %v91
    %152 = vmatpush.msra.mxu0 %v90
    %153 = vmatmul.f32.gmra.mxu0 %v126
    %v154 = vpop.f32.mrf.mxu0
    %v155 = vadd.f32 %v107, %v154
    %156 = vmatmul.f32.gmra.mxu0 %v129
    %v157 = vpop.f32.mrf.mxu0
    %v158 = vadd.f32 %v112, %v157
    %159 = vmatmul.f32.gmra.mxu0 %v132
    %v160 = vpop.f32.mrf.mxu0
    %v161 = vadd.f32 %v117, %v160
    %162 = vmatmul.f32.gmra.mxu0 %v135
    %v163 = vpop.f32.mrf.mxu0
    %v164 = vadd.f32 %v122, %v163
    %165 = vdwg.mxu0
    %v166 = vtanh.pop %v155
    %v167 = vtanh.pop %v158
    %v168 = vtanh.pop %v161
    %v169 = vtanh.pop %v164
    %s170 = scalar_lea.vmem %s1, 64
    %v171 = vld [vmem:[%s170] sm:$0xff]
    %v172 = vld [vmem:[%s170 + $0x8] sm:$0xff]
    %v173 = vld [vmem:[%s170 + $0x10] sm:$0xff]
    %v174 = vld [vmem:[%s170 + $0x18] sm:$0xff]
    %s175 = scalar_lea.vmem %s2, 64
    %v176 = vld [vmem:[%s175] sm:$0xff]
    %v177 = vld [vmem:[%s175 + $0x8] sm:$0xff]
    %v178 = vld [vmem:[%s175 + $0x10] sm:$0xff]
    %v179 = vld [vmem:[%s175 + $0x18] sm:$0xff]
    %181 = vset.pattern.permute.xlu0 0
    %182 = vperm.xlu0 %181, %v176
    %v183 = vpop.permute.xlu0 %182
    %186 = vset.pattern.permute.xlu0 0
    %187 = vperm.xlu0 %186, %v177
    %v188 = vpop.permute.xlu0 %187
    %191 = vset.pattern.permute.xlu0 0
    %192 = vperm.xlu0 %191, %v178
    %v193 = vpop.permute.xlu0 %192
    %196 = vset.pattern.permute.xlu0 0
    %197 = vperm.xlu0 %196, %v179
    %v198 = vpop.permute.xlu0 %197
    %v201 = vsel %vm124, %v171, 0
    %v204 = vsel %vm124, %v172, 0
    %v207 = vsel %vm124, %v173, 0
    %v210 = vsel %vm124, %v174, 0
    %212 = vmatpush.msra.mxu0 0.0
    %213 = vmatpush.msra.mxu0 0.0
    %214 = vmatpush.msra.mxu0 0.0
    %215 = vmatpush.msra.mxu0 0.0
    %216 = vmatpush.msra.mxu0 0.0
    %217 = vmatpush.msra.mxu0 0.0
    %218 = vmatpush.msra.mxu0 0.0
    %219 = vmatpush.msra.mxu0 0.0
    %220 = vmatpush.msra.mxu0 0.0
    %221 = vmatpush.msra.mxu0 0.0
    %222 = vmatpush.msra.mxu0 0.0
    %223 = vmatpush.msra.mxu0 0.0
    %224 = vmatpush.msra.mxu0 %v169
    %225 = vmatpush.msra.mxu0 %v168
    %226 = vmatpush.msra.mxu0 %v167
    %227 = vmatpush.msra.mxu0 %v166
    %228 = vmatmul.f32.gmra.mxu0 %v201
    %v229 = vpop.f32.mrf.mxu0
    %v230 = vadd.f32 %v183, %v229
    %231 = vmatmul.f32.gmra.mxu0 %v204
    %v232 = vpop.f32.mrf.mxu0
    %v233 = vadd.f32 %v188, %v232
    %234 = vmatmul.f32.gmra.mxu0 %v207
    %v235 = vpop.f32.mrf.mxu0
    %v236 = vadd.f32 %v193, %v235
    %237 = vmatmul.f32.gmra.mxu0 %v210
    %v238 = vpop.f32.mrf.mxu0
    %v239 = vadd.f32 %v198, %v238
    %240 = vdwg.mxu0
    %v241 = vtanh.pop %v230
    %v242 = vtanh.pop %v233
    %v243 = vtanh.pop %v236
    %v244 = vtanh.pop %v239
    %s245 = scalar_lea.vmem %s1, 96
    %v246 = vld [vmem:[%s245] sm:$0xff]
    %v247 = vld [vmem:[%s245 + $0x8] sm:$0xff]
    %v248 = vld [vmem:[%s245 + $0x10] sm:$0xff]
    %v249 = vld [vmem:[%s245 + $0x18] sm:$0xff]
    %s250 = scalar_lea.vmem %s2, 96
    %v251 = vld [vmem:[%s250] sm:$0xff]
    %v252 = vld [vmem:[%s250 + $0x8] sm:$0xff]
    %v253 = vld [vmem:[%s250 + $0x10] sm:$0xff]
    %v254 = vld [vmem:[%s250 + $0x18] sm:$0xff]
    %256 = vset.pattern.permute.xlu0 0
    %257 = vperm.xlu0 %256, %v251
    %v258 = vpop.permute.xlu0 %257
    %261 = vset.pattern.permute.xlu0 0
    %262 = vperm.xlu0 %261, %v252
    %v263 = vpop.permute.xlu0 %262
    %266 = vset.pattern.permute.xlu0 0
    %267 = vperm.xlu0 %266, %v253
    %v268 = vpop.permute.xlu0 %267
    %271 = vset.pattern.permute.xlu0 0
    %272 = vperm.xlu0 %271, %v254
    %v273 = vpop.permute.xlu0 %272
    %v276 = vsel %vm124, %v246, 0
    %v279 = vsel %vm124, %v247, 0
    %v282 = vsel %vm124, %v248, 0
    %v285 = vsel %vm124, %v249, 0
    %287 = vmatpush.msra.mxu0 0.0
    %288 = vmatpush.msra.mxu0 0.0
    %289 = vmatpush.msra.mxu0 0.0
    %290 = vmatpush.msra.mxu0 0.0
    %291 = vmatpush.msra.mxu0 0.0
    %292 = vmatpush.msra.mxu0 0.0
    %293 = vmatpush.msra.mxu0 0.0
    %294 = vmatpush.msra.mxu0 0.0
    %295 = vmatpush.msra.mxu0 0.0
    %296 = vmatpush.msra.mxu0 0.0
    %297 = vmatpush.msra.mxu0 0.0
    %298 = vmatpush.msra.mxu0 0.0
    %299 = vmatpush.msra.mxu0 %v244
    %300 = vmatpush.msra.mxu0 %v243
    %301 = vmatpush.msra.mxu0 %v242
    %302 = vmatpush.msra.mxu0 %v241
    %303 = vmatmul.f32.gmra.mxu0 %v276
    %v304 = vpop.f32.mrf.mxu0
    %v305 = vadd.f32 %v258, %v304
    %306 = vmatmul.f32.gmra.mxu0 %v279
    %v307 = vpop.f32.mrf.mxu0
    %v308 = vadd.f32 %v263, %v307
    %309 = vmatmul.f32.gmra.mxu0 %v282
    %v310 = vpop.f32.mrf.mxu0
    %v311 = vadd.f32 %v268, %v310
    %312 = vmatmul.f32.gmra.mxu0 %v285
    %v313 = vpop.f32.mrf.mxu0
    %v314 = vadd.f32 %v273, %v313
    %315 = vdwg.mxu0
    %v316 = vtanh.pop %v305
    %v317 = vtanh.pop %v308
    %v318 = vtanh.pop %v311
    %v319 = vtanh.pop %v314
    %s320 = scalar_lea.vmem %s1, 128
    %v321 = vld [vmem:[%s320] sm:$0xff]
    %s322 = scalar_lea.vmem %s2, 128
    %v323 = vld [vmem:[%s322] sm:$0xff]
    %325 = vset.pattern.permute.xlu0 0
    %326 = vperm.xlu0 %325, %v323
    %v327 = vpop.permute.xlu0 %326
    %v330 = vsel %vm124, %v321, 0
    %332 = vmatpush.msra.mxu0 0.0
    %333 = vmatpush.msra.mxu0 0.0
    %334 = vmatpush.msra.mxu0 0.0
    %335 = vmatpush.msra.mxu0 0.0
    %336 = vmatpush.msra.mxu0 0.0
    %337 = vmatpush.msra.mxu0 0.0
    %338 = vmatpush.msra.mxu0 0.0
    %339 = vmatpush.msra.mxu0 0.0
    %340 = vmatpush.msra.mxu0 0.0
    %341 = vmatpush.msra.mxu0 0.0
    %342 = vmatpush.msra.mxu0 0.0
    %343 = vmatpush.msra.mxu0 0.0
    %344 = vmatpush.msra.mxu0 %v319
    %345 = vmatpush.msra.mxu0 %v318
    %346 = vmatpush.msra.mxu0 %v317
    %347 = vmatpush.msra.mxu0 %v316
    %348 = vmatmul.f32.gmra.mxu0 %v330
    %v349 = vpop.f32.mrf.mxu0
    %v350 = vadd.f32 %v327, %v349
    %351 = vdwg.mxu0
    %352 = vst [vmem:[#allocation2] sm:$0xf] %v350
    // Predicated region
    $region14: #{tpu_custom_call.1} parent=1 // pred_check
      _
    $region15: #{tpu_custom_call.1} parent=1 // pred_check_branch
      %354 = sbr.rel (0) target = $region17
    $region16: #{tpu_custom_call.1} parent=1 // pred_region
      %356 = vsyncadd [#allocation3], 0
      %s358 = sshll.u32 [#allocation2], 4
      %s359 = int_to_ptr.vmem [resolvable:$true] %s358
      %s360 = sshll.u32 %s3, 4
      %s361 = int_to_ptr.hbm [resolvable:$true] %s360
      %363 = dma.vmem_to_hbm [thread:$0]  %s359, 64, %s361, [#allocation3]
    $region17: #{tpu_custom_call.1} parent=1 // pred_fallthru
      _
    // Predicated region
    $region18: #{tpu_custom_call.1} parent=1 // pred_check
      _
    $region19: #{tpu_custom_call.1} parent=1 // pred_check_branch
      %365 = sbr.rel (0) target = $region21
    $region20: #{tpu_custom_call.1} parent=1 // pred_region
      %367 = dma.done [#allocation3], 64
    $region21: #{tpu_custom_call.1} parent=1 // pred_fallthru
      _
    %368 = vsyncpa [#allocation3], 1

</llo_original>
